<compile_context>
chip_gen: v7x
topology: tpu7x:2x2x1
jax: 0.10.0
libtpu: 0.0.40
codegen_flags: <defaults>
</compile_context>

<pallas_src>
import functools

import jax
import jax.numpy as jnp
from jax.experimental import pallas as pl
from jax.experimental.pallas import tpu as pltpu


def _round_up(x, m):
    return ((x + m - 1) // m) * m


def _fused_kernel(x_ref, w_ref, sh_ref, o_ref, *, compute_dtype):
    # x_ref: (1, C, tile_n) input dtype (f32)   w_ref: (O, C) bf16
    # sh_ref: (O, 1) f32                        o_ref: (1, O, tile_n) out dtype
    x = x_ref[0].astype(compute_dtype)                  # in-kernel cast (VPU slack)
    w = w_ref[...]
    # Conv1d(k=1) with BN scale pre-folded: MXU matmul, f32 accumulation.
    y = jnp.dot(w, x, preferred_element_type=jnp.float32)   # (O, tile_n) f32
    y = y + sh_ref[...]                                     # folded BN shift
    o_ref[0] = jnp.maximum(y, 0.0).astype(o_ref.dtype)      # ReLU, lane-dense store


def conv1d_bn_relu(x_bcn, params, *, tile_n=4096, compute_dtype=jnp.bfloat16,
                   out_dtype=None, vmem_budget_bytes=40 * 1024 * 1024):
    """Fused Conv1d(k=1) + BatchNorm1d(eval) + ReLU.

    x_bcn:  (B, C_in, N) float32, native PyTorch NCL layout (no transposes,
            no wrapper pad/astype — the kernel reads it as-is).
    params: {"w": (C_out, C_in) BN-scale-folded weight, "shift": (C_out, 1)}.
    out_dtype: defaults to compute_dtype (bf16) — the output is the dominant
            HBM stream; pass jnp.float32 for precision-sensitive consumers.
    """
    B, C, N = x_bcn.shape
    w = params["w"].astype(compute_dtype)        # (O, C), tiny cast
    sh = params["shift"].astype(jnp.float32)     # (O, 1)
    O = w.shape[0]
    if out_dtype is None:
        out_dtype = compute_dtype

    x_bytes = jnp.dtype(x_bcn.dtype).itemsize
    o_bytes = jnp.dtype(out_dtype).itemsize
    w_bytes = jnp.dtype(w.dtype).itemsize

    # --- choose the point tile: multiple of 128 (lane-dense, unmasked stores)
    #     or the full extent N (legal even when N % 128 != 0). ---------------
    tile_n = int(tile_n)
    if tile_n >= N:
        tile_n = N                                   # single full-extent block
    else:
        tile_n = max(128, (tile_n // 128) * 128)     # 128-aligned; tail masked

    # --- cap tile against a VMEM budget (double-buffered in/out blocks plus
    #     the f32 intermediate); keeps v7x's 64 MiB physical VMEM safe. ------
    def _vmem_estimate(tn):
        return (2 * C * tn * x_bytes          # input block, double-buffered
                + 2 * O * tn * o_bytes        # output block, double-buffered
                + O * tn * 4                  # f32 matmul/epilogue intermediate
                + 2 * (O * C * w_bytes + O * 4))   # resident weight + shift

    while tile_n > 128 and _vmem_estimate(tile_n) > vmem_budget_bytes:
        tile_n = max(128, _round_up(tile_n // 2, 128))

    grid = (B, pl.cdiv(N, tile_n))   # partial last tile: Pallas masks the tail

    flops = 2 * B * O * C * N
    bytes_accessed = (B * C * N * x_bytes        # input (read once, f32)
                      + O * C * w_bytes + O * 4  # weights + shift
                      + B * O * N * o_bytes)     # output

    kernel = functools.partial(_fused_kernel, compute_dtype=compute_dtype)

    return pl.pallas_call(
        kernel,
        out_shape=jax.ShapeDtypeStruct((B, O, N), out_dtype),
        grid_spec=pltpu.PrefetchScalarGridSpec(
            num_scalar_prefetch=0,
            grid=grid,
            in_specs=[
                pl.BlockSpec((1, C, tile_n), lambda b, n: (b, 0, n)),  # x tile
                pl.BlockSpec((O, C), lambda b, n: (0, 0)),             # weight (resident)
                pl.BlockSpec((O, 1), lambda b, n: (0, 0)),             # shift (resident)
            ],
            out_specs=pl.BlockSpec((1, O, tile_n), lambda b, n: (b, 0, n)),
        ),
        compiler_params=pltpu.CompilerParams(
            dimension_semantics=("parallel", "parallel"),
            vmem_limit_bytes=64 * 1024 * 1024),
        cost_estimate=pl.CostEstimate(flops=flops, transcendentals=0,
                                      bytes_accessed=bytes_accessed),
    )(x_bcn, w, sh)


def make_params(key, in_channels, out_channels, eps=1e-5):
    """Synthetic parameters mirroring the PyTorch module, with Conv+BN folded.

    Conv1d: weight (O, C, 1) -> (O, C), bias (O,); BN1d: gamma/beta/mean/var (O,)
    Fold:   scale = gamma / sqrt(var + eps)
            w_fold = scale[:, None] * W_conv
            shift  = scale * (bias - mean) + beta
    """
    C, O = in_channels, out_channels
    ks = jax.random.split(key, 6)
    conv_w = jax.random.normal(ks[0], (O, C), jnp.float32) * 0.2
    conv_b = jax.random.normal(ks[1], (O,), jnp.float32) * 0.1
    bn_g = 1.0 + 0.1 * jax.random.normal(ks[2], (O,), jnp.float32)
    bn_b = 0.1 * jax.random.normal(ks[3], (O,), jnp.float32)
    bn_m = 0.1 * jax.random.normal(ks[4], (O,), jnp.float32)
    bn_v = jnp.abs(jax.random.normal(ks[5], (O,), jnp.float32)) + 0.5

    scale = bn_g / jnp.sqrt(bn_v + eps)                  # (O,)
    w_fold = conv_w * scale[:, None]                     # (O, C)
    shift = scale * (conv_b - bn_m) + bn_b               # (O,)
    return {"w": w_fold, "shift": shift.reshape(O, 1)}


def reference(x_bcn, params, compute_dtype=jnp.bfloat16):
    """Pure-JAX reference with the same bf16 input quantization, f32 math."""
    x = x_bcn.astype(compute_dtype).astype(jnp.float32)        # (B, C, N)
    w = params["w"].astype(compute_dtype).astype(jnp.float32)  # (O, C)
    y = jnp.einsum("oc,bcn->bon", w, x) + params["shift"][None]
    return jnp.maximum(y, 0.0)


if __name__ == "__main__":
    key = jax.random.PRNGKey(0)
    k_x, k_p = jax.random.split(key)

    # Small NCL shapes consistent with the module (kernel_size=1 pointwise conv);
    # ragged N exercises the partial-tile / masking path.
    B, C_in, C_out, N = 2, 16, 32, 1000

    x = jax.random.normal(k_x, (B, C_in, N), jnp.float32)
    params = make_params(k_p, C_in, C_out)

    out = conv1d_bn_relu(x, params, tile_n=4096, compute_dtype=jnp.bfloat16)
    out = jax.block_until_ready(out)

    ref = reference(x, params, compute_dtype=jnp.bfloat16)
    assert out.shape == (B, C_out, N)
    err = jnp.max(jnp.abs(out.astype(jnp.float32) - ref))
    # bf16 output store -> ~1e-2 relative tolerance.
    assert jnp.allclose(out.astype(jnp.float32), ref, atol=2e-2, rtol=2e-2), float(err)

    print("KERNEL_OK")
</pallas_src>

<mosaic_0001>
module attributes {stable_mosaic.version = 11 : i64} {
  func.func @_fused_kernel(%arg0: i32, %arg1: i32, %arg2: memref<1x16x1000xf32, #tpu.memory_space<vmem>>, %arg3: memref<32x16xbf16, #tpu.memory_space<vmem>>, %arg4: memref<32x1xf32, #tpu.memory_space<vmem>>, %arg5: memref<1x32x1000xbf16, #tpu.memory_space<vmem>>) attributes {dimension_semantics = [#tpu.dimension_semantics<parallel>, #tpu.dimension_semantics<parallel>], iteration_bounds = array<i64: 2, 1>, scalar_prefetch = 0 : i64, scratch_operands = 0 : i64, tpu.core_type = #tpu.core_type<tc>, window_params = [{transform_indices = @transform_0, window_bounds = array<i64: 1, 16, 1000>}, {pipeline_mode = #tpu.pipeline_mode<synchronous>, transform_indices = @transform_1, window_bounds = array<i64: 32, 16>}, {pipeline_mode = #tpu.pipeline_mode<synchronous>, transform_indices = @transform_2, window_bounds = array<i64: 32, 1>}, {transform_indices = @transform_3, window_bounds = array<i64: 1, 32, 1000>}]} {
    %c0 = arith.constant 0 : index
    %c0_0 = arith.constant 0 : index
    %c0_1 = arith.constant 0 : index
    %0 = vector.load %arg2[%c0, %c0_0, %c0_1] : memref<1x16x1000xf32, #tpu.memory_space<vmem>>, vector<1x16x1000xf32>
    %1 = vector.shape_cast %0 : vector<1x16x1000xf32> to vector<16x1000xf32>
    %2 = arith.truncf %1 : vector<16x1000xf32> to vector<16x1000xbf16>
    %c0_2 = arith.constant 0 : index
    %c0_3 = arith.constant 0 : index
    %3 = vector.load %arg3[%c0_2, %c0_3] : memref<32x16xbf16, #tpu.memory_space<vmem>>, vector<32x16xbf16>
    %cst = arith.constant dense<0.000000e+00> : vector<32x1000xf32>
    %4 = tpu.matmul %3, %2, %cst {dimension_numbers = #tpu.dot_dimension_numbers<[1], [0], [0], [1], [0, 0, 1, 1], [], []>} : vector<32x16xbf16>, vector<16x1000xbf16>, vector<32x1000xf32> -> vector<32x1000xf32>
    %c0_4 = arith.constant 0 : index
    %c0_5 = arith.constant 0 : index
    %5 = vector.load %arg4[%c0_4, %c0_5] : memref<32x1xf32, #tpu.memory_space<vmem>>, vector<32x1xf32>
    %6 = vector.broadcast %5 : vector<32x1xf32> to vector<32x1000xf32>
    %7 = arith.addf %4, %6 : vector<32x1000xf32>
    %cst_6 = arith.constant 0.000000e+00 : f32
    %8 = vector.broadcast %cst_6 : f32 to vector<32x1000xf32>
    %9 = arith.maximumf %7, %8 : vector<32x1000xf32>
    %10 = arith.truncf %9 : vector<32x1000xf32> to vector<32x1000xbf16>
    %c0_7 = arith.constant 0 : index
    %c0_8 = arith.constant 0 : index
    %c0_9 = arith.constant 0 : index
    %11 = vector.load %arg5[%c0_7, %c0_8, %c0_9] : memref<1x32x1000xbf16, #tpu.memory_space<vmem>>, vector<1x32x1000xbf16>
    %12 = vector.shape_cast %11 : vector<1x32x1000xbf16> to vector<32x1000xbf16>
    %13 = vector.shape_cast %10 : vector<32x1000xbf16> to vector<1x32x1000xbf16>
    tpu.vector_store %arg5[%c0_7, %c0_8, %c0_9], %13 {strides = array<i32>} : memref<1x32x1000xbf16, #tpu.memory_space<vmem>>, vector<1x32x1000xbf16>,
    return
  }
  func.func @transform_0(%arg0: i32, %arg1: i32) -> (i32, i32, i32) {
    %c0_i32 = arith.constant 0 : i32
    %c0_i32_0 = arith.constant 0 : i32
    return %arg0, %c0_i32, %arg1 : i32, i32, i32
  }
  func.func @transform_1(%arg0: i32, %arg1: i32) -> (i32, i32) {
    %c0_i32 = arith.constant 0 : i32
    %c0_i32_0 = arith.constant 0 : i32
    %c0_i32_1 = arith.constant 0 : i32
    return %c0_i32, %c0_i32_0 : i32, i32
  }
  func.func @transform_2(%arg0: i32, %arg1: i32) -> (i32, i32) {
    %c0_i32 = arith.constant 0 : i32
    %c0_i32_0 = arith.constant 0 : i32
    %c0_i32_1 = arith.constant 0 : i32
    return %c0_i32, %c0_i32_0 : i32, i32
  }
  func.func @transform_3(%arg0: i32, %arg1: i32) -> (i32, i32, i32) {
    %c0_i32 = arith.constant 0 : i32
    %c0_i32_0 = arith.constant 0 : i32
    return %arg0, %c0_i32, %arg1 : i32, i32, i32
  }
}

</mosaic_0001>

<llo_original>
// kernel: tpu_custom_call.1
$region0: #{tpu_custom_call.1}
  #allocation0 [shape = 'u32[]', space=smem, size = 0x4, offset = 0x4, fixed_abs, tag = 'smem constant byte address 0x4 - core index']
  #allocation1 [shape = 'u32[144,128]{1,0:T(1,128)}', space=vmem, size = 0x12000, scoped, tag = 'internal scratch']
  %s0 = inlined_call_operand.hbm [shape: f32[2,16,1000], index: 0, kind: input, shape index: {}]
  %s1 = inlined_call_operand.hbm [shape: bf16[32,16], index: 1, kind: input, shape index: {}]
  %s2 = inlined_call_operand.hbm [shape: f32[32,1], index: 2, kind: input, shape index: {}]
  %s3 = inlined_call_operand.hbm [shape: bf16[2,32,1000], index: 3, kind: output, shape index: {}]
  %s4 = sld [smem:[#allocation0]]
  $region57: #{tpu_custom_call.1} parent=0
    _
  %s6 = ssub.s32 1, %s4
  %s7 = scalar_select 0, %s6, %s4
  $region1: #{tpu_custom_call.1} parent=0
    #allocation2 [shape = 'u8[131072]{0}', space=vmem, size = 0x20000, scoped, tag = 'input window, operand 0']
    #allocation3 [shape = 's32[2]{0}', space=sflag, size = 0x8, scoped, tag = 'scoped memory for tpu_custom_call.1']
    #allocation4 [shape = 's32[2]{0}', space=sflag, size = 0x8, scoped, tag = 'scoped memory for tpu_custom_call.1']
    #allocation5 [shape = 'u8[8192]{0}', space=vmem, size = 0x2000, scoped, tag = 'input window, operand 1, single buffered']
    #allocation6 [shape = 's32[1]{0}', space=sflag, size = 0x4, scoped, tag = 'scoped memory for tpu_custom_call.1']
    #allocation7 [shape = 'u8[16384]{0}', space=vmem, size = 0x4000, scoped, tag = 'input window, operand 2, single buffered']
    #allocation8 [shape = 'u8[131072]{0}', space=vmem, size = 0x20000, scoped, tag = 'output window, operand 0']
    %8 = vsyncpa [#allocation3], 0
    %s9 = scalar_lea.sflag [#allocation3], 1
    %10 = vsyncpa %s9, 0
    %11 = vsyncpa [#allocation6], 0
    %12 = vsyncpa [#allocation4], 0
    %s13 = scalar_lea.sflag [#allocation4], 1
    %14 = vsyncpa %s13, 0
    loop: start=0, step=1, limit=4
    $region2: #{tpu_custom_call.1} parent=1 // loop_pre_header
      _
    $region3: #{tpu_custom_call.1} parent=1 // loop_header
      %s16 = sphi 0, %s20
      %p17 = scmp.ge.s32.totalorder %s16, 4
      %s23 = sphi 0, %s35
      %s24 = sphi 0, %s31
      %s25 = sphi 0, %s23
      %s26 = sphi 0, %s24
      %s27 = sphi 0, %s25
      %s28 = sphi 0, %s26
      %s40 = sphi 0, %s42
      %s43 = sphi 0, %s40
      %s44 = sphi 0, %s43
      %s60 = sphi 0, %s44
      %s64 = sphi 0, %s64
      %s66 = sphi 0, %s64
      %s67 = sphi 0, %s66
      %s81 = sphi 0, %s67
      %s85 = sphi 0, %s85
      %s87 = sphi 0, %s85
      %s88 = sphi 0, %s87
      %s102 = sphi 0, %s88
      %s110 = sphi 0, %s112
      %s113 = sphi 0, %s110
      %s114 = sphi 0, %s113
      %s130 = sphi 0, %s114
    $region4: #{tpu_custom_call.1} parent=1 // loop_header_branch
      %19 = sbr.rel (%p17) target = $region8
    $region5: #{tpu_custom_call.1} parent=1 // loop_body
      %s21 = ssub.s32 %s16, 1
      %s22 = ssub.s32 %s16, 2
      %s29 = sadd.s32 1, %s24
      %p30 = scmp.ge.s32.totalorder %s29, 1
      %s31 = scalar_select %p30, 0, %s29
      %s32 = sadd.s32 1, %s23
      %s33 = scalar_select %p30, %s32, %s23
      %p34 = scmp.ge.s32.totalorder %s33, 2
      %s35 = scalar_select %p34, 0, %s33
      %s36 = ssub.s32 %s23, %s35
      %s37 = ssub.s32 %s24, %s31
      %s38 = sor.u32 %s36, %s37
      %p39 = scmp.eq.s32.totalorder %s38, 0
      %s41 = sadd.s32 %s40, 1
      %s42 = scalar_select %p39, %s40, %s41
      %p45 = pneg %p39
      %p46 = scmp.eq.s32.totalorder %s16, 1
      %p47 = por %p45, %p46
      %p48 = scmp.ne.s32.totalorder %s40, %s43
      %p49 = scmp.eq.s32.totalorder %s16, 0
      %p50 = por %p48, %p49
      %p51 = scmp.ne.s32.totalorder %s40, %s43
      %p52 = scmp.eq.s32.totalorder %s21, 1
      %p53 = por %p51, %p52
      %p54 = scmp.ne.s32.totalorder %s43, %s44
      %p55 = scmp.eq.s32.totalorder %s21, 0
      %p56 = por %p54, %p55
      %p57 = scmp.ne.s32.totalorder %s43, %s44
      %p58 = scmp.eq.s32.totalorder %s22, 1
      %p59 = por %p57, %p58
      %p61 = scmp.ne.s32.totalorder %s44, %s60
      %p62 = scmp.eq.s32.totalorder %s22, 0
      %p63 = por %p61, %p62
      %s65 = sadd.s32 %s64, 1
      %p68 = scmp.eq.s32.totalorder %s16, 1
      %p69 = scmp.ne.s32.totalorder %s64, %s66
      %p70 = scmp.eq.s32.totalorder %s16, 0
      %p71 = por %p69, %p70
      %p72 = scmp.ne.s32.totalorder %s64, %s66
      %p73 = scmp.eq.s32.totalorder %s21, 1
      %p74 = por %p72, %p73
      %p75 = scmp.ne.s32.totalorder %s66, %s67
      %p76 = scmp.eq.s32.totalorder %s21, 0
      %p77 = por %p75, %p76
      %p78 = scmp.ne.s32.totalorder %s66, %s67
      %p79 = scmp.eq.s32.totalorder %s22, 1
      %p80 = por %p78, %p79
      %p82 = scmp.ne.s32.totalorder %s67, %s81
      %p83 = scmp.eq.s32.totalorder %s22, 0
      %p84 = por %p82, %p83
      %s86 = sadd.s32 %s85, 1
      %p89 = scmp.eq.s32.totalorder %s16, 1
      %p90 = scmp.ne.s32.totalorder %s85, %s87
      %p91 = scmp.eq.s32.totalorder %s16, 0
      %p92 = por %p90, %p91
      %p93 = scmp.ne.s32.totalorder %s85, %s87
      %p94 = scmp.eq.s32.totalorder %s21, 1
      %p95 = por %p93, %p94
      %p96 = scmp.ne.s32.totalorder %s87, %s88
      %p97 = scmp.eq.s32.totalorder %s21, 0
      %p98 = por %p96, %p97
      %p99 = scmp.ne.s32.totalorder %s87, %s88
      %p100 = scmp.eq.s32.totalorder %s22, 1
      %p101 = por %p99, %p100
      %p103 = scmp.ne.s32.totalorder %s88, %s102
      %p104 = scmp.eq.s32.totalorder %s22, 0
      %p105 = por %p103, %p104
      %s106 = ssub.s32 %s23, %s35
      %s107 = ssub.s32 %s24, %s31
      %s108 = sor.u32 %s106, %s107
      %p109 = scmp.eq.s32.totalorder %s108, 0
      %s111 = sadd.s32 %s110, 1
      %s112 = scalar_select %p109, %s110, %s111
      %p115 = pneg %p109
      %p116 = scmp.eq.s32.totalorder %s16, 1
      %p117 = por %p115, %p116
      %p118 = scmp.ne.s32.totalorder %s110, %s113
      %p119 = scmp.eq.s32.totalorder %s16, 0
      %p120 = por %p118, %p119
      %p121 = scmp.ne.s32.totalorder %s110, %s113
      %p122 = scmp.eq.s32.totalorder %s21, 1
      %p123 = por %p121, %p122
      %p124 = scmp.ne.s32.totalorder %s113, %s114
      %p125 = scmp.eq.s32.totalorder %s21, 0
      %p126 = por %p124, %p125
      %p127 = scmp.ne.s32.totalorder %s113, %s114
      %p128 = scmp.eq.s32.totalorder %s22, 1
      %p129 = por %p127, %p128
      %p131 = scmp.ne.s32.totalorder %s114, %s130
      %p132 = scmp.eq.s32.totalorder %s22, 0
      %p133 = por %p131, %p132
      %p134 = scmp.le.s32.totalorder 1, %s16
      %p135 = scmp.lt.s32.totalorder %s16, 3
      %p136 = pnand %p134, %p135
      %p137 = pneg %p136
      // Predicated region
      $region9: #{tpu_custom_call.1} parent=5 // pred_check
        _
      $region10: #{tpu_custom_call.1} parent=5 // pred_check_branch
        %139 = sbr.rel (%p136) target = $region12
      $region11: #{tpu_custom_call.1} parent=5 // pred_region
        %s140 = ssub.s32 %s16, 1
        // Predicated region
        $region13: #{tpu_custom_call.1} parent=11 // pred_check
          %p141 = pneg %p77
        $region14: #{tpu_custom_call.1} parent=11 // pred_check_branch
          %143 = sbr.rel (%p141) target = $region16
        $region15: #{tpu_custom_call.1} parent=11 // pred_region
          %s145 = ssub.s32 256, 256
          %146 = vsyncadd [#allocation6], %s145
          %s147 = sshll.u32 [#allocation5], 4
          %s148 = int_to_ptr.vmem [resolvable:$true] %s147
          %153 = dma.hbm_to_vmem [thread:$0]  %s1, 256, %s148, [#allocation6], 64, 64, 4
        $region16: #{tpu_custom_call.1} parent=11 // pred_fallthru
          _
        // Predicated region
        $region17: #{tpu_custom_call.1} parent=11 // pred_check
          %p154 = pneg %p98
        $region18: #{tpu_custom_call.1} parent=11 // pred_check_branch
          %156 = sbr.rel (%p154) target = $region20
        $region19: #{tpu_custom_call.1} parent=11 // pred_region
          %s158 = ssub.s32 512, 512
          %159 = vsyncadd [#allocation6], %s158
          %s160 = sshll.u32 [#allocation7], 4
          %s161 = int_to_ptr.vmem [resolvable:$true] %s160
          %166 = dma.hbm_to_vmem [thread:$0]  %s2, 512, %s161, [#allocation6], 128, 128, 8
        $region20: #{tpu_custom_call.1} parent=11 // pred_fallthru
          _
      $region12: #{tpu_custom_call.1} parent=5 // pred_fallthru
        _
      %p167 = scmp.lt.s32.totalorder %s16, 2
      // Predicated region
      $region21: #{tpu_custom_call.1} parent=5 // pred_check
        %p168 = pneg %p167
      $region22: #{tpu_custom_call.1} parent=5 // pred_check_branch
        %170 = sbr.rel (%p168) target = $region24
      $region23: #{tpu_custom_call.1} parent=5 // pred_region
        // Predicated region
        $region25: #{tpu_custom_call.1} parent=23 // pred_check
          %p171 = pneg %p50
        $region26: #{tpu_custom_call.1} parent=23 // pred_check_branch
          %173 = sbr.rel (%p171) target = $region28
        $region27: #{tpu_custom_call.1} parent=23 // pred_region
          %s174 = sand.u32 %s40, 1
          %s175 = scalar_lea.sflag [#allocation3], %s174
          %s176 = sand.u32 %s40, 1
          %s177 = smul.addr %s176, 128
          %s178 = scalar_lea.vmem [#allocation2], %s177
          %s179 = smul.u32 8, %s24
          %s181 = ssub.s32 2048, 2048
          %182 = vsyncadd %s175, %s181
          %s183 = smul.addr %s23, 16
          %s184 = sadd.s32 %s179, %s183
          %s185 = smul.addr %s184, 128
          %s186 = scalar_lea.hbm %s0, %s185
          %s187 = sshll.u32 %s178, 4
          %s188 = int_to_ptr.vmem [resolvable:$true] %s187
          %193 = dma.hbm_to_vmem [thread:$0]  %s186, 2048, %s188, %s175, 1024, 1024, 64
        $region28: #{tpu_custom_call.1} parent=23 // pred_fallthru
          _
      $region24: #{tpu_custom_call.1} parent=5 // pred_fallthru
        _
      %p194 = scmp.le.s32.totalorder 1, %s16
      %p195 = scmp.lt.s32.totalorder %s16, 3
      %p196 = pnand %p194, %p195
      %p197 = pneg %p196
      // Predicated region
      $region29: #{tpu_custom_call.1} parent=5 // pred_check
        _
      $region30: #{tpu_custom_call.1} parent=5 // pred_check_branch
        %199 = sbr.rel (%p196) target = $region32
      $region31: #{tpu_custom_call.1} parent=5 // pred_region
        %s200 = ssub.s32 %s16, 1
        %s201 = sand.u32 %s43, 1
        %s202 = scalar_lea.sflag [#allocation3], %s201
        %s203 = sand.u32 %s43, 1
        %s204 = smul.addr %s203, 128
        %s205 = scalar_lea.vmem [#allocation2], %s204
        // Predicated region
        $region33: #{tpu_custom_call.1} parent=31 // pred_check
          %p206 = pneg %p56
        $region34: #{tpu_custom_call.1} parent=31 // pred_check_branch
          %208 = sbr.rel (%p206) target = $region36
        $region35: #{tpu_custom_call.1} parent=31 // pred_region
          %209 = dma.done %s202, 2048
        $region36: #{tpu_custom_call.1} parent=31 // pred_fallthru
          _
        // Predicated region
        $region37: #{tpu_custom_call.1} parent=31 // pred_check
          %p210 = pneg %p77
        $region38: #{tpu_custom_call.1} parent=31 // pred_check_branch
          %212 = sbr.rel (%p210) target = $region40
        $region39: #{tpu_custom_call.1} parent=31 // pred_region
          %213 = dma.done [#allocation6], 256
        $region40: #{tpu_custom_call.1} parent=31 // pred_fallthru
          _
        // Predicated region
        $region41: #{tpu_custom_call.1} parent=31 // pred_check
          %p214 = pneg %p98
        $region42: #{tpu_custom_call.1} parent=31 // pred_check_branch
          %216 = sbr.rel (%p214) target = $region44
        $region43: #{tpu_custom_call.1} parent=31 // pred_region
          %217 = dma.done [#allocation6], 512
        $region44: #{tpu_custom_call.1} parent=31 // pred_fallthru
          _
        %s218 = sand.u32 %s43, 1
        %s219 = scalar_lea.sflag [#allocation3], %s218
        %s220 = sand.u32 %s43, 1
        %s221 = smul.addr %s220, 128
        %s222 = scalar_lea.vmem [#allocation2], %s221
        %p223 = pneg %p56
        %p224 = pneg %p53
        %p225 = pneg %p77
        %p226 = pneg %p74
        %p227 = pneg %p98
        %p228 = pneg %p95
        %p229 = pneg %p126
        %p230 = pneg %p123
        %s231 = sand.u32 %s113, 1
        %s232 = scalar_lea.sflag [#allocation4], %s231
        %s233 = sand.u32 %s113, 1
        %s234 = smul.addr %s233, 128
        %s235 = scalar_lea.vmem [#allocation8], %s234
        %s236 = smul.u32 8, %s26
        %s237 = smul.u32 8, %s26
        %v239 = vld [vmem:[%s205] sm:$0xff]
        %v240 = vld [vmem:[%s205 + $0x8] sm:$0xff]
        %v241 = vld [vmem:[%s205 + $0x10] sm:$0xff]
        %v242 = vld [vmem:[%s205 + $0x18] sm:$0xff]
        %v243 = vld [vmem:[%s205 + $0x20] sm:$0xff]
        %v244 = vld [vmem:[%s205 + $0x28] sm:$0xff]
        %v245 = vld [vmem:[%s205 + $0x30] sm:$0xff]
        %v246 = vld [vmem:[%s205 + $0x38] sm:$0xff]
        %v247 = vld [vmem:[%s205 + $0x40] sm:$0xff]
        %v248 = vld [vmem:[%s205 + $0x48] sm:$0xff]
        %v249 = vld [vmem:[%s205 + $0x50] sm:$0xff]
        %v250 = vld [vmem:[%s205 + $0x58] sm:$0xff]
        %v251 = vld [vmem:[%s205 + $0x60] sm:$0xff]
        %v252 = vld [vmem:[%s205 + $0x68] sm:$0xff]
        %v253 = vld [vmem:[%s205 + $0x70] sm:$0xff]
        %v254 = vld [vmem:[%s205 + $0x78] sm:$0xff]
        %v255 = vpack.c.bf16 %v247, %v239
        %v256 = vpack.c.bf16 %v248, %v240
        %v257 = vpack.c.bf16 %v249, %v241
        %v258 = vpack.c.bf16 %v250, %v242
        %v259 = vpack.c.bf16 %v251, %v243
        %v260 = vpack.c.bf16 %v252, %v244
        %v261 = vpack.c.bf16 %v253, %v245
        %v262 = vpack.c.bf16 %v254, %v246
        %v263 = vld [vmem:[#allocation5] sm:$0xf]
        %v264 = vld [vmem:[#allocation5 + $0x4] sm:$0xf]
        %v265 = vld [vmem:[#allocation5 + $0x8] sm:$0xf]
        %v266 = vld [vmem:[#allocation5 + $0xc] sm:$0xf]
        %v267 = vld [vmem:[#allocation7] sm:$0xff]
        %v268 = vld [vmem:[#allocation7 + $0x8] sm:$0xff]
        %v269 = vld [vmem:[#allocation7 + $0x10] sm:$0xff]
        %v270 = vld [vmem:[#allocation7 + $0x18] sm:$0xff]
        %272 = vset.pattern.permute.xlu0 0
        %273 = vperm.xlu0 %272, %v267
        %v274 = vpop.permute.xlu0 %273
        %277 = vset.pattern.permute.xlu0 0
        %278 = vperm.xlu0 %277, %v268
        %v279 = vpop.permute.xlu0 %278
        %282 = vset.pattern.permute.xlu0 0
        %283 = vperm.xlu0 %282, %v269
        %v284 = vpop.permute.xlu0 %283
        %287 = vset.pattern.permute.xlu0 0
        %288 = vperm.xlu0 %287, %v270
        %v289 = vpop.permute.xlu0 %288
        %v295 = vunpack.c.l.b16 %v263
        %v296 = vunpack.c.l.b16 %v264
        %v297 = vunpack.c.l.b16 %v265
        %v298 = vunpack.c.l.b16 %v266
        %v299 = vpack.c.b16 %v296, %v295
        %v300 = vpack.c.b16 %v298, %v297
        %vm301 = vcmask 130048
        %v303 = vsel %vm301, %v299, 0
        %v306 = vsel %vm301, %v300, 0
        %308 = vmatprep.subr.bf16.mxu0 %v256
        %309 = vmatpush1.bf16.msra.mxu0 %v255
        %310 = vmatprep.subr.bf16.mxu0 0
        %311 = vmatpush1.bf16.msra.mxu0 0
        %312 = vmatprep.subr.bf16.mxu0 0
        %313 = vmatpush1.bf16.msra.mxu0 0
        %314 = vmatprep.subr.bf16.mxu0 0
        %315 = vmatpush1.bf16.msra.mxu0 0
        %316 = vmatprep.subr.bf16.mxu0 0
        %317 = vmatpush1.bf16.msra.mxu0 0
        %318 = vmatprep.subr.bf16.mxu0 0
        %319 = vmatpush1.bf16.msra.mxu0 0
        %320 = vmatprep.subr.bf16.mxu0 0
        %321 = vmatpush1.bf16.msra.mxu0 0
        %322 = vmatprep.subr.bf16.mxu0 0
        %323 = vmatpush1.bf16.msra.mxu0 0
        %324 = vmatprep.subr.bf16.mxu0 0
        %325 = vmatpush1.bf16.msra.mxu0 0
        %326 = vmatprep.subr.bf16.mxu0 0
        %327 = vmatpush1.bf16.msra.mxu0 0
        %328 = vmatprep.subr.bf16.mxu0 0
        %329 = vmatpush1.bf16.msra.mxu0 0
        %330 = vmatprep.subr.bf16.mxu0 0
        %331 = vmatpush1.bf16.msra.mxu0 0
        %332 = vmatprep.subr.bf16.mxu0 0
        %333 = vmatpush1.bf16.msra.mxu0 0
        %334 = vmatprep.subr.bf16.mxu0 0
        %335 = vmatpush1.bf16.msra.mxu0 0
        %336 = vmatprep.subr.bf16.mxu0 0
        %337 = vmatpush1.bf16.msra.mxu0 0
        %338 = vmatprep.subr.bf16.mxu0 0
        %339 = vmatpush1.bf16.msra.mxu0 0
        %340 = vmatprep.mubr.bf16.mxu0 0
        %341 = vmatmul.mubr.bf16.gmra.mrb[0].mxu0 %v303
        %v342 = vpop.f32.mrb[0].mxu0
        %v343 = vadd.f32 %v274, %v342
        %v344 = vpop.f32.mrb[0].mxu0
        %v345 = vadd.f32 %v274, %v344
        %v346 = vpop.f32.mrb[0].mxu0
        %v347 = vadd.f32 %v279, %v346
        %v348 = vpop.f32.mrb[0].mxu0
        %v349 = vadd.f32 %v279, %v348
        %350 = vmatprep.mubr.bf16.mxu0 0
        %351 = vmatmul.mubr.bf16.gmra.mrb[0].mxu0 %v306
        %v352 = vpop.f32.mrb[0].mxu0
        %v353 = vadd.f32 %v284, %v352
        %v354 = vpop.f32.mrb[0].mxu0
        %v355 = vadd.f32 %v284, %v354
        %v356 = vpop.f32.mrb[0].mxu0
        %v357 = vadd.f32 %v289, %v356
        %v358 = vpop.f32.mrb[0].mxu0
        %v359 = vadd.f32 %v289, %v358
        %360 = vdwg.mxu0
        %361 = vmatprep.subr.bf16.mxu0 %v258
        %362 = vmatpush1.bf16.msra.mxu0 %v257
        %363 = vmatprep.subr.bf16.mxu0 0
        %364 = vmatpush1.bf16.msra.mxu0 0
        %365 = vmatprep.subr.bf16.mxu0 0
        %366 = vmatpush1.bf16.msra.mxu0 0
        %367 = vmatprep.subr.bf16.mxu0 0
        %368 = vmatpush1.bf16.msra.mxu0 0
        %369 = vmatprep.subr.bf16.mxu0 0
        %370 = vmatpush1.bf16.msra.mxu0 0
        %371 = vmatprep.subr.bf16.mxu0 0
        %372 = vmatpush1.bf16.msra.mxu0 0
        %373 = vmatprep.subr.bf16.mxu0 0
        %374 = vmatpush1.bf16.msra.mxu0 0
        %375 = vmatprep.subr.bf16.mxu0 0
        %376 = vmatpush1.bf16.msra.mxu0 0
        %377 = vmatprep.subr.bf16.mxu0 0
        %378 = vmatpush1.bf16.msra.mxu0 0
        %379 = vmatprep.subr.bf16.mxu0 0
        %380 = vmatpush1.bf16.msra.mxu0 0
        %381 = vmatprep.subr.bf16.mxu0 0
        %382 = vmatpush1.bf16.msra.mxu0 0
        %383 = vmatprep.subr.bf16.mxu0 0
        %384 = vmatpush1.bf16.msra.mxu0 0
        %385 = vmatprep.subr.bf16.mxu0 0
        %386 = vmatpush1.bf16.msra.mxu0 0
        %387 = vmatprep.subr.bf16.mxu0 0
        %388 = vmatpush1.bf16.msra.mxu0 0
        %389 = vmatprep.subr.bf16.mxu0 0
        %390 = vmatpush1.bf16.msra.mxu0 0
        %391 = vmatprep.subr.bf16.mxu0 0
        %392 = vmatpush1.bf16.msra.mxu0 0
        %393 = vmatprep.mubr.bf16.mxu0 0
        %394 = vmatmul.mubr.bf16.gmra.mrb[0].mxu0 %v303
        %v395 = vpop.f32.mrb[0].mxu0
        %v396 = vadd.f32 %v274, %v395
        %v397 = vpop.f32.mrb[0].mxu0
        %v398 = vadd.f32 %v274, %v397
        %v399 = vpop.f32.mrb[0].mxu0
        %v400 = vadd.f32 %v279, %v399
        %v401 = vpop.f32.mrb[0].mxu0
        %v402 = vadd.f32 %v279, %v401
        %403 = vmatprep.mubr.bf16.mxu0 0
        %404 = vmatmul.mubr.bf16.gmra.mrb[0].mxu0 %v306
        %v405 = vpop.f32.mrb[0].mxu0
        %v406 = vadd.f32 %v284, %v405
        %v407 = vpop.f32.mrb[0].mxu0
        %v408 = vadd.f32 %v284, %v407
        %v409 = vpop.f32.mrb[0].mxu0
        %v410 = vadd.f32 %v289, %v409
        %v411 = vpop.f32.mrb[0].mxu0
        %v412 = vadd.f32 %v289, %v411
        %413 = vdwg.mxu0
        %414 = vmatprep.subr.bf16.mxu0 %v260
        %415 = vmatpush1.bf16.msra.mxu0 %v259
        %416 = vmatprep.subr.bf16.mxu0 0
        %417 = vmatpush1.bf16.msra.mxu0 0
        %418 = vmatprep.subr.bf16.mxu0 0
        %419 = vmatpush1.bf16.msra.mxu0 0
        %420 = vmatprep.subr.bf16.mxu0 0
        %421 = vmatpush1.bf16.msra.mxu0 0
        %422 = vmatprep.subr.bf16.mxu0 0
        %423 = vmatpush1.bf16.msra.mxu0 0
        %424 = vmatprep.subr.bf16.mxu0 0
        %425 = vmatpush1.bf16.msra.mxu0 0
        %426 = vmatprep.subr.bf16.mxu0 0
        %427 = vmatpush1.bf16.msra.mxu0 0
        %428 = vmatprep.subr.bf16.mxu0 0
        %429 = vmatpush1.bf16.msra.mxu0 0
        %430 = vmatprep.subr.bf16.mxu0 0
        %431 = vmatpush1.bf16.msra.mxu0 0
        %432 = vmatprep.subr.bf16.mxu0 0
        %433 = vmatpush1.bf16.msra.mxu0 0
        %434 = vmatprep.subr.bf16.mxu0 0
        %435 = vmatpush1.bf16.msra.mxu0 0
        %436 = vmatprep.subr.bf16.mxu0 0
        %437 = vmatpush1.bf16.msra.mxu0 0
        %438 = vmatprep.subr.bf16.mxu0 0
        %439 = vmatpush1.bf16.msra.mxu0 0
        %440 = vmatprep.subr.bf16.mxu0 0
        %441 = vmatpush1.bf16.msra.mxu0 0
        %442 = vmatprep.subr.bf16.mxu0 0
        %443 = vmatpush1.bf16.msra.mxu0 0
        %444 = vmatprep.subr.bf16.mxu0 0
        %445 = vmatpush1.bf16.msra.mxu0 0
        %446 = vmatprep.mubr.bf16.mxu0 0
        %447 = vmatmul.mubr.bf16.gmra.mrb[0].mxu0 %v303
        %v448 = vpop.f32.mrb[0].mxu0
        %v449 = vadd.f32 %v274, %v448
        %v450 = vpop.f32.mrb[0].mxu0
        %v451 = vadd.f32 %v274, %v450
        %v452 = vpop.f32.mrb[0].mxu0
        %v453 = vadd.f32 %v279, %v452
        %v454 = vpop.f32.mrb[0].mxu0
        %v455 = vadd.f32 %v279, %v454
        %456 = vmatprep.mubr.bf16.mxu0 0
        %457 = vmatmul.mubr.bf16.gmra.mrb[0].mxu0 %v306
        %v458 = vpop.f32.mrb[0].mxu0
        %v459 = vadd.f32 %v284, %v458
        %v460 = vpop.f32.mrb[0].mxu0
        %v461 = vadd.f32 %v284, %v460
        %v462 = vpop.f32.mrb[0].mxu0
        %v463 = vadd.f32 %v289, %v462
        %v464 = vpop.f32.mrb[0].mxu0
        %v465 = vadd.f32 %v289, %v464
        %466 = vdwg.mxu0
        %467 = vmatprep.subr.bf16.mxu0 %v262
        %468 = vmatpush1.bf16.msra.mxu0 %v261
        %469 = vmatprep.subr.bf16.mxu0 0
        %470 = vmatpush1.bf16.msra.mxu0 0
        %471 = vmatprep.subr.bf16.mxu0 0
        %472 = vmatpush1.bf16.msra.mxu0 0
        %473 = vmatprep.subr.bf16.mxu0 0
        %474 = vmatpush1.bf16.msra.mxu0 0
        %475 = vmatprep.subr.bf16.mxu0 0
        %476 = vmatpush1.bf16.msra.mxu0 0
        %477 = vmatprep.subr.bf16.mxu0 0
        %478 = vmatpush1.bf16.msra.mxu0 0
        %479 = vmatprep.subr.bf16.mxu0 0
        %480 = vmatpush1.bf16.msra.mxu0 0
        %481 = vmatprep.subr.bf16.mxu0 0
        %482 = vmatpush1.bf16.msra.mxu0 0
        %483 = vmatprep.subr.bf16.mxu0 0
        %484 = vmatpush1.bf16.msra.mxu0 0
        %485 = vmatprep.subr.bf16.mxu0 0
        %486 = vmatpush1.bf16.msra.mxu0 0
        %487 = vmatprep.subr.bf16.mxu0 0
        %488 = vmatpush1.bf16.msra.mxu0 0
        %489 = vmatprep.subr.bf16.mxu0 0
        %490 = vmatpush1.bf16.msra.mxu0 0
        %491 = vmatprep.subr.bf16.mxu0 0
        %492 = vmatpush1.bf16.msra.mxu0 0
        %493 = vmatprep.subr.bf16.mxu0 0
        %494 = vmatpush1.bf16.msra.mxu0 0
        %495 = vmatprep.subr.bf16.mxu0 0
        %496 = vmatpush1.bf16.msra.mxu0 0
        %497 = vmatprep.subr.bf16.mxu0 0
        %498 = vmatpush1.bf16.msra.mxu0 0
        %499 = vmatprep.mubr.bf16.mxu0 0
        %500 = vmatmul.mubr.bf16.gmra.mrb[0].mxu0 %v303
        %v501 = vpop.f32.mrb[0].mxu0
        %v502 = vadd.f32 %v274, %v501
        %v503 = vpop.f32.mrb[0].mxu0
        %v504 = vadd.f32 %v274, %v503
        %v505 = vpop.f32.mrb[0].mxu0
        %v506 = vadd.f32 %v279, %v505
        %v507 = vpop.f32.mrb[0].mxu0
        %v508 = vadd.f32 %v279, %v507
        %509 = vmatprep.mubr.bf16.mxu0 0
        %510 = vmatmul.mubr.bf16.gmra.mrb[0].mxu0 %v306
        %v511 = vpop.f32.mrb[0].mxu0
        %v512 = vadd.f32 %v284, %v511
        %v513 = vpop.f32.mrb[0].mxu0
        %v514 = vadd.f32 %v284, %v513
        %v515 = vpop.f32.mrb[0].mxu0
        %v516 = vadd.f32 %v289, %v515
        %v517 = vpop.f32.mrb[0].mxu0
        %v518 = vadd.f32 %v289, %v517
        %519 = vdwg.mxu0
        %v520 = vmax.f32 %v343, 0.0
        %v521 = vmax.f32 %v345, 0.0
        %v522 = vmax.f32 %v396, 0.0
        %v523 = vmax.f32 %v398, 0.0
        %v524 = vmax.f32 %v449, 0.0
        %v525 = vmax.f32 %v451, 0.0
        %v526 = vmax.f32 %v502, 0.0
        %v527 = vmax.f32 %v504, 0.0
        %v528 = vmax.f32 %v347, 0.0
        %v529 = vmax.f32 %v349, 0.0
        %v530 = vmax.f32 %v400, 0.0
        %v531 = vmax.f32 %v402, 0.0
        %v532 = vmax.f32 %v453, 0.0
        %v533 = vmax.f32 %v455, 0.0
        %v534 = vmax.f32 %v506, 0.0
        %v535 = vmax.f32 %v508, 0.0
        %v536 = vmax.f32 %v353, 0.0
        %v537 = vmax.f32 %v355, 0.0
        %v538 = vmax.f32 %v406, 0.0
        %v539 = vmax.f32 %v408, 0.0
        %v540 = vmax.f32 %v459, 0.0
        %v541 = vmax.f32 %v461, 0.0
        %v542 = vmax.f32 %v512, 0.0
        %v543 = vmax.f32 %v514, 0.0
        %v544 = vmax.f32 %v357, 0.0
        %v545 = vmax.f32 %v359, 0.0
        %v546 = vmax.f32 %v410, 0.0
        %v547 = vmax.f32 %v412, 0.0
        %v548 = vmax.f32 %v463, 0.0
        %v549 = vmax.f32 %v465, 0.0
        %v550 = vmax.f32 %v516, 0.0
        %v551 = vmax.f32 %v518, 0.0
        %v552 = vpack.c.bf16 %v528, %v520
        %v553 = vpack.c.bf16 %v529, %v521
        %v554 = vpack.c.bf16 %v530, %v522
        %v555 = vpack.c.bf16 %v531, %v523
        %v556 = vpack.c.bf16 %v532, %v524
        %v557 = vpack.c.bf16 %v533, %v525
        %v558 = vpack.c.bf16 %v534, %v526
        %v559 = vpack.c.bf16 %v535, %v527
        %v560 = vpack.c.bf16 %v544, %v536
        %v561 = vpack.c.bf16 %v545, %v537
        %v562 = vpack.c.bf16 %v546, %v538
        %v563 = vpack.c.bf16 %v547, %v539
        %v564 = vpack.c.bf16 %v548, %v540
        %v565 = vpack.c.bf16 %v549, %v541
        %v566 = vpack.c.bf16 %v550, %v542
        %v567 = vpack.c.bf16 %v551, %v543
        %v584 = vunpack.c.l.b16 %v552
        %v585 = vunpack.c.l.b16 %v553
        %v586 = vunpack.c.l.b16 %v554
        %v587 = vunpack.c.l.b16 %v555
        %v588 = vunpack.c.l.b16 %v556
        %v589 = vunpack.c.l.b16 %v557
        %v590 = vunpack.c.l.b16 %v558
        %v591 = vunpack.c.l.b16 %v559
        %v592 = vunpack.c.h.b16 %v552
        %v593 = vunpack.c.h.b16 %v553
        %v594 = vunpack.c.h.b16 %v554
        %v595 = vunpack.c.h.b16 %v555
        %v596 = vunpack.c.h.b16 %v556
        %v597 = vunpack.c.h.b16 %v557
        %v598 = vunpack.c.h.b16 %v558
        %v599 = vunpack.c.h.b16 %v559
        %v600 = vunpack.c.l.b16 %v560
        %v601 = vunpack.c.l.b16 %v561
        %v602 = vunpack.c.l.b16 %v562
        %v603 = vunpack.c.l.b16 %v563
        %v604 = vunpack.c.l.b16 %v564
        %v605 = vunpack.c.l.b16 %v565
        %v606 = vunpack.c.l.b16 %v566
        %v607 = vunpack.c.l.b16 %v567
        %v608 = vunpack.c.h.b16 %v560
        %v609 = vunpack.c.h.b16 %v561
        %v610 = vunpack.c.h.b16 %v562
        %v611 = vunpack.c.h.b16 %v563
        %v612 = vunpack.c.h.b16 %v564
        %v613 = vunpack.c.h.b16 %v565
        %v614 = vunpack.c.h.b16 %v566
        %v615 = vunpack.c.h.b16 %v567
        %v616 = vpack.c.b16 %v585, %v584
        %v617 = vpack.c.b16 %v587, %v586
        %v618 = vpack.c.b16 %v589, %v588
        %v619 = vpack.c.b16 %v591, %v590
        %v620 = vpack.c.b16 %v593, %v592
        %v621 = vpack.c.b16 %v595, %v594
        %v622 = vpack.c.b16 %v597, %v596
        %v623 = vpack.c.b16 %v599, %v598
        %v624 = vpack.c.b16 %v601, %v600
        %v625 = vpack.c.b16 %v603, %v602
        %v626 = vpack.c.b16 %v605, %v604
        %v627 = vpack.c.b16 %v607, %v606
        %v628 = vpack.c.b16 %v609, %v608
        %v629 = vpack.c.b16 %v611, %v610
        %v630 = vpack.c.b16 %v613, %v612
        %v631 = vpack.c.b16 %v615, %v614
        %648 = vst [vmem:[%s235] sm:$0xff] %v616
        %649 = vst [vmem:[%s235 + $0x8] sm:$0xff] %v617
        %650 = vst [vmem:[%s235 + $0x10] sm:$0xff] %v618
        %vm651 = vcmask 1043456
        %vm652 = vcmask 850948
        %vm653 = vmor %vm652, %vm651
        %654 = vst.msk [vmem:[%s235 + $0x18] sm:$0xff] %vm653, %v619
        %655 = vst [vmem:[%s235 + $0x20] sm:$0xff] %v620
        %656 = vst [vmem:[%s235 + $0x28] sm:$0xff] %v621
        %657 = vst [vmem:[%s235 + $0x30] sm:$0xff] %v622
        %658 = vst.msk [vmem:[%s235 + $0x38] sm:$0xff] %vm653, %v623
        %659 = vst [vmem:[%s235 + $0x40] sm:$0xff] %v624
        %660 = vst [vmem:[%s235 + $0x48] sm:$0xff] %v625
        %661 = vst [vmem:[%s235 + $0x50] sm:$0xff] %v626
        %662 = vst.msk [vmem:[%s235 + $0x58] sm:$0xff] %vm653, %v627
        %663 = vst [vmem:[%s235 + $0x60] sm:$0xff] %v628
        %664 = vst [vmem:[%s235 + $0x68] sm:$0xff] %v629
        %665 = vst [vmem:[%s235 + $0x70] sm:$0xff] %v630
        %666 = vst.msk [vmem:[%s235 + $0x78] sm:$0xff] %vm653, %v631
        %s667 = sand.u32 %s113, 1
        %s668 = scalar_lea.sflag [#allocation4], %s667
        %s669 = sand.u32 %s113, 1
        %s670 = smul.addr %s669, 128
        %s671 = scalar_lea.vmem [#allocation8], %s670
        // Predicated region
        $region45: #{tpu_custom_call.1} parent=31 // pred_check
          %p672 = pneg %p123
        $region46: #{tpu_custom_call.1} parent=31 // pred_check_branch
          %674 = sbr.rel (%p672) target = $region48
        $region47: #{tpu_custom_call.1} parent=31 // pred_region
          %s675 = smul.u32 8, %s26
          %s677 = ssub.s32 2048, 2048
          %678 = vsyncadd %s668, %s677
          %s679 = smul.addr %s25, 32
          %s680 = sadd.s32 %s675, %s679
          %s681 = smul.addr %s680, 64
          %s682 = scalar_lea.hbm %s3, %s681
          %s683 = sshll.u32 %s671, 4
          %s684 = int_to_ptr.vmem [resolvable:$true] %s683
          %689 = dma.vmem_to_hbm [thread:$0]  %s684, 2048, %s682, %s668, 512, 512, 32
        $region48: #{tpu_custom_call.1} parent=31 // pred_fallthru
          _
      $region32: #{tpu_custom_call.1} parent=5 // pred_fallthru
        _
      %p690 = scmp.le.s32.totalorder 2, %s16
      // Predicated region
      $region49: #{tpu_custom_call.1} parent=5 // pred_check
        %p691 = pneg %p690
      $region50: #{tpu_custom_call.1} parent=5 // pred_check_branch
        %693 = sbr.rel (%p691) target = $region52
      $region51: #{tpu_custom_call.1} parent=5 // pred_region
        %s694 = ssub.s32 %s16, 2
        // Predicated region
        $region53: #{tpu_custom_call.1} parent=51 // pred_check
          %p695 = pneg %p129
        $region54: #{tpu_custom_call.1} parent=51 // pred_check_branch
          %697 = sbr.rel (%p695) target = $region56
        $region55: #{tpu_custom_call.1} parent=51 // pred_region
          %s698 = sand.u32 %s114, 1
          %s699 = scalar_lea.sflag [#allocation4], %s698
          %s700 = sand.u32 %s114, 1
          %s701 = smul.addr %s700, 128
          %s702 = scalar_lea.vmem [#allocation8], %s701
          %703 = dma.done %s699, 2048
        $region56: #{tpu_custom_call.1} parent=51 // pred_fallthru
          _
      $region52: #{tpu_custom_call.1} parent=5 // pred_fallthru
        _
    $region6: #{tpu_custom_call.1} parent=1 // loop_footer
      %s20 = sadd.s32 1, %s16
    $region7: #{tpu_custom_call.1} parent=1 // loop_footer_branch
      %15 = sbr.rel target = $region3
    $region8: #{tpu_custom_call.1} parent=1 // loop_exit
      _
    %704 = vsyncpa [#allocation3], 1
    %s705 = scalar_lea.sflag [#allocation3], 1
    %706 = vsyncpa %s705, 1
    %707 = vsyncpa [#allocation6], 1
    %708 = vsyncpa [#allocation4], 1
    %s709 = scalar_lea.sflag [#allocation4], 1
    %710 = vsyncpa %s709, 1

</llo_original>
